<compile_context>
chip_gen: v5e
topology: v5e:2x2
jax: 0.10.0
libtpu: 0.0.40
codegen_flags: <defaults>
</compile_context>

<pallas_src>
import jax
import jax.numpy as jnp
from jax.experimental import pallas as pl
from jax.experimental.pallas import tpu as pltpu

# ---------------- model dimensions (deberta-v2-xlarge head) ------------------
EMBEDDING_SIZE = 1536   # microsoft/deberta-v2-xlarge hidden size
HIDDEN = 256            # linear1 output size (folded away at inference)
NUM_LABELS = 3          # number_of_labels
BATCH = 8               # small serving batch; raise toward 128/256 to fill MXU rows
SEQ = 8
VOCAB = 64              # synthetic vocab for the encoder stand-in


# ------------------------------- Pallas kernel -------------------------------
def fused_head_kernel(ids_ref, mask_ref, emb_ref, w_ref, b_ref, out_ref):
    """Fused forward: CLS embedding gather + mask + folded linear head.

    ids_ref  : (B, 1) int32   VMEM   token id at position 0 (CLS)
    mask_ref : (B, 1) f32     VMEM   attention mask at position 0
    emb_ref  : (V, E) bf16    VMEM   embedding table (encoder stand-in)
    w_ref    : (E, L) bf16    VMEM   folded head weight  W1 @ W2
    b_ref    : (1, L) f32     VMEM   folded head bias    b1 @ W2 + b2
    out_ref  : (B, L) f32     VMEM   logits
    """
    B = ids_ref.shape[0]
    V = emb_ref.shape[0]

    # --- CLS gather as a one-hot matmul on the MXU (exact for bf16 entries) ---
    vocab_iota = jax.lax.broadcasted_iota(jnp.int32, (B, V), 1)
    onehot = (vocab_iota == ids_ref[...]).astype(emb_ref.dtype)         # (B, V)
    cls = jnp.dot(onehot, emb_ref[...],
                  preferred_element_type=jnp.float32)                   # (B, E) f32

    # --- mask multiply (stand-in for attention masking of the stub encoder) ---
    cls = (cls * mask_ref[...]).astype(w_ref.dtype)                     # (B, E) bf16

    # --- folded classifier head: logits = cls @ (W1 @ W2) + (b1 @ W2 + b2) ----
    logits = jnp.dot(cls, w_ref[...],
                     preferred_element_type=jnp.float32)                # (B, L) f32
    out_ref[...] = (logits + b_ref[...]).astype(out_ref.dtype)


def fused_forward(cls_ids, cls_mask, emb_bf16, w_eff_bf16, b_eff):
    """cls_ids: (B,1) i32; cls_mask: (B,1) f32; emb: (V,E) bf16;
    w_eff: (E,L) bf16; b_eff: (1,L) f32  ->  (B, L) f32 logits."""
    B = cls_ids.shape[0]
    V, E = emb_bf16.shape
    L = w_eff_bf16.shape[1]

    cost = pl.CostEstimate(
        flops=2 * B * V * E + 2 * B * E * L + B * E,
        transcendentals=0,
        bytes_accessed=(cls_ids.size * 4 + cls_mask.size * 4
                        + emb_bf16.size * 2 + w_eff_bf16.size * 2
                        + b_eff.size * 4 + B * L * 4),
    )

    return pl.pallas_call(
        fused_head_kernel,
        out_shape=jax.ShapeDtypeStruct((B, L), jnp.float32),
        # Single invocation (no grid): whole arrays resident in VMEM (<~200 KiB).
        in_specs=[
            pl.BlockSpec(memory_space=pltpu.MemorySpace.VMEM),   # cls ids  (B, 1)
            pl.BlockSpec(memory_space=pltpu.MemorySpace.VMEM),   # cls mask (B, 1)
            pl.BlockSpec(memory_space=pltpu.MemorySpace.VMEM),   # emb      (V, E)
            pl.BlockSpec(memory_space=pltpu.MemorySpace.VMEM),   # W_eff    (E, L)
            pl.BlockSpec(memory_space=pltpu.MemorySpace.VMEM),   # b_eff    (1, L)
        ],
        out_specs=pl.BlockSpec(memory_space=pltpu.MemorySpace.VMEM),
        cost_estimate=cost,
    )(cls_ids, cls_mask, emb_bf16, w_eff_bf16, b_eff)


# --------------------------- offline parameter fold --------------------------
def fold_head_params(w1, b1, w2, b2):
    """No activation/LayerNorm between linear1 and linear2 in CustomBERTModel,
    so the head folds exactly: logits = cls @ (W1 @ W2) + (b1 @ W2 + b2)."""
    hi = jax.lax.Precision.HIGHEST
    w_eff = jnp.dot(w1, w2, precision=hi)          # (E, L)
    b_eff = jnp.dot(b1, w2, precision=hi) + b2     # (1, L)
    return w_eff, b_eff


# ------------------------------ forward wrapper ------------------------------
# TODO(synk): the pretrained DeBERTa-v2-xlarge encoder (>99.9% of the real
# FLOPs) is not implemented; a deterministic embedding lookup (fused into the
# kernel above) stands in for last_hidden_state[:, 0, :].  The multiplicative
# mask is NOT equivalent to real attention masking; it only keeps the stand-in
# deterministic.
def forward(ids, mask, emb_bf16, w_eff_bf16, b_eff):
    # Only the CLS position is ever consumed — feed just those scalars.
    cls_ids = ids[:, 0:1].astype(jnp.int32)               # (B, 1)
    cls_mask = mask[:, 0:1].astype(jnp.float32)           # (B, 1)
    return fused_forward(cls_ids, cls_mask, emb_bf16, w_eff_bf16, b_eff)


def init_params(key):
    k_emb, k_w1, k_b1, k_w2, k_b2 = jax.random.split(key, 5)
    s1 = 1.0 / jnp.sqrt(EMBEDDING_SIZE)
    s2 = 1.0 / jnp.sqrt(HIDDEN)
    return {
        "emb": jax.random.normal(k_emb, (VOCAB, EMBEDDING_SIZE), jnp.float32) * 0.02,
        # nn.Linear(embedding_size, 256): uniform(-1/sqrt(in), 1/sqrt(in)),
        # stored as (in, out) so x @ W + b == PyTorch x @ W_pt.T + b.
        "w1": jax.random.uniform(k_w1, (EMBEDDING_SIZE, HIDDEN), jnp.float32, -s1, s1),
        "b1": jax.random.uniform(k_b1, (1, HIDDEN), jnp.float32, -s1, s1),
        # nn.Linear(256, number_of_labels)
        "w2": jax.random.uniform(k_w2, (HIDDEN, NUM_LABELS), jnp.float32, -s2, s2),
        "b2": jax.random.uniform(k_b2, (1, NUM_LABELS), jnp.float32, -s2, s2),
    }


if __name__ == "__main__":
    key = jax.random.PRNGKey(0)
    k_params, k_ids = jax.random.split(key)
    params = init_params(k_params)

    # One-time offline fold of the two Linear layers + bf16 cast of the big operands.
    w_eff_f32, b_eff = fold_head_params(params["w1"], params["b1"],
                                        params["w2"], params["b2"])
    w_eff_bf16 = w_eff_f32.astype(jnp.bfloat16)
    emb_bf16 = params["emb"].astype(jnp.bfloat16)

    ids = jax.random.randint(k_ids, (BATCH, SEQ), 0, VOCAB, dtype=jnp.int32)
    mask = jnp.ones((BATCH, SEQ), dtype=jnp.int32)

    out = forward(ids, mask, emb_bf16, w_eff_bf16, b_eff)
    out = jax.block_until_ready(out)

    # ---------------------------- reference checks ----------------------------
    hi = jax.lax.Precision.HIGHEST
    mask_f = mask[:, 0:1].astype(jnp.float32)

    # (a) folded math with the SAME bf16-quantized operands the kernel consumes
    cls_q = emb_bf16.astype(jnp.float32)[ids[:, 0]] * mask_f                # (B, E)
    cls_q = cls_q.astype(jnp.bfloat16).astype(jnp.float32)
    ref_folded = jnp.dot(cls_q, w_eff_bf16.astype(jnp.float32), precision=hi) + b_eff

    # (b) original two-layer PyTorch head semantics, full f32, unquantized emb
    cls_f32 = params["emb"][ids[:, 0]] * mask_f
    ref_module = (jnp.dot(jnp.dot(cls_f32, params["w1"], precision=hi) + params["b1"],
                          params["w2"], precision=hi) + params["b2"])

    assert out.shape == (BATCH, NUM_LABELS)
    assert jnp.allclose(out, ref_folded, atol=1e-4, rtol=1e-3), \
        jnp.max(jnp.abs(out - ref_folded))
    assert jnp.allclose(out, ref_module, atol=5e-3, rtol=5e-2), \
        jnp.max(jnp.abs(out - ref_module))

    print("KERNEL_OK")
</pallas_src>

<mosaic_0001>
module attributes {stable_mosaic.version = 11 : i64} {
  func.func @fused_head_kernel(%arg0: memref<8x1xi32, #tpu.memory_space<vmem>>, %arg1: memref<8x1xf32, #tpu.memory_space<vmem>>, %arg2: memref<64x1536xbf16, #tpu.memory_space<vmem>>, %arg3: memref<1536x3xbf16, #tpu.memory_space<vmem>>, %arg4: memref<1x3xf32, #tpu.memory_space<vmem>>, %arg5: memref<8x3xf32, #tpu.memory_space<vmem>>) attributes {dimension_semantics = [], scalar_prefetch = 0 : i64, scratch_operands = 0 : i64, tpu.core_type = #tpu.core_type<tc>} {
    %0 = tpu.iota {dimensions = array<i32: 1>} : vector<8x64xi32>
    %c0 = arith.constant 0 : index
    %c0_0 = arith.constant 0 : index
    %1 = vector.load %arg0[%c0, %c0_0] : memref<8x1xi32, #tpu.memory_space<vmem>>, vector<8x1xi32>
    %2 = vector.broadcast %1 : vector<8x1xi32> to vector<8x64xi32>
    %3 = arith.cmpi eq, %0, %2 : vector<8x64xi32>
    %4 = arith.extui %3 : vector<8x64xi1> to vector<8x64xi32>
    %5 = arith.sitofp %4 : vector<8x64xi32> to vector<8x64xf32>
    %6 = arith.truncf %5 : vector<8x64xf32> to vector<8x64xbf16>
    %c0_1 = arith.constant 0 : index
    %c0_2 = arith.constant 0 : index
    %7 = vector.load %arg2[%c0_1, %c0_2] : memref<64x1536xbf16, #tpu.memory_space<vmem>>, vector<64x1536xbf16>
    %cst = arith.constant dense<0.000000e+00> : vector<8x1536xf32>
    %8 = tpu.matmul %6, %7, %cst {dimension_numbers = #tpu.dot_dimension_numbers<[1], [0], [0], [1], [0, 0, 1, 1], [], []>} : vector<8x64xbf16>, vector<64x1536xbf16>, vector<8x1536xf32> -> vector<8x1536xf32>
    %c0_3 = arith.constant 0 : index
    %c0_4 = arith.constant 0 : index
    %9 = vector.load %arg1[%c0_3, %c0_4] : memref<8x1xf32, #tpu.memory_space<vmem>>, vector<8x1xf32>
    %10 = vector.broadcast %9 : vector<8x1xf32> to vector<8x1536xf32>
    %11 = arith.mulf %8, %10 : vector<8x1536xf32>
    %12 = arith.truncf %11 : vector<8x1536xf32> to vector<8x1536xbf16>
    %c0_5 = arith.constant 0 : index
    %c0_6 = arith.constant 0 : index
    %13 = vector.load %arg3[%c0_5, %c0_6] : memref<1536x3xbf16, #tpu.memory_space<vmem>>, vector<1536x3xbf16>
    %cst_7 = arith.constant dense<0.000000e+00> : vector<8x3xf32>
    %14 = tpu.matmul %12, %13, %cst_7 {dimension_numbers = #tpu.dot_dimension_numbers<[1], [0], [0], [1], [0, 0, 1, 1], [], []>} : vector<8x1536xbf16>, vector<1536x3xbf16>, vector<8x3xf32> -> vector<8x3xf32>
    %c0_8 = arith.constant 0 : index
    %c0_9 = arith.constant 0 : index
    %15 = vector.load %arg4[%c0_8, %c0_9] : memref<1x3xf32, #tpu.memory_space<vmem>>, vector<1x3xf32>
    %16 = vector.broadcast %15 : vector<1x3xf32> to vector<8x3xf32>
    %17 = arith.addf %14, %16 : vector<8x3xf32>
    %c0_10 = arith.constant 0 : index
    %c0_11 = arith.constant 0 : index
    %18 = vector.load %arg5[%c0_10, %c0_11] : memref<8x3xf32, #tpu.memory_space<vmem>>, vector<8x3xf32>
    tpu.vector_store %arg5[%c0_10, %c0_11], %17 {strides = array<i32>} : memref<8x3xf32, #tpu.memory_space<vmem>>, vector<8x3xf32>,
    return
  }
}

</mosaic_0001>

<llo_original>
// kernel: tpu_custom_call.1
$region0: #{tpu_custom_call.1}
  #allocation0 [shape = 'u32[]', space=smem, size = 0x4, offset = 0x4, fixed_abs, tag = 'smem constant byte address 0x4 - core index']
  #allocation1 [shape = 'u32[72,128]{1,0:T(1,128)}', space=vmem, size = 0x9000, scoped, tag = 'internal scratch']
  %s0 = inlined_call_operand.vmem [shape: s32[8,1], index: 0, kind: input, shape index: {}]
  %s1 = inlined_call_operand.vmem [shape: f32[8,1], index: 1, kind: input, shape index: {}]
  %s2 = inlined_call_operand.vmem [shape: bf16[64,1536], index: 2, kind: input, shape index: {}]
  %s3 = inlined_call_operand.vmem [shape: bf16[1536,3], index: 3, kind: input, shape index: {}]
  %s4 = inlined_call_operand.vmem [shape: f32[1,3], index: 4, kind: input, shape index: {}]
  %s5 = inlined_call_operand.vmem [shape: f32[8,3], index: 5, kind: output, shape index: {}]
  %s6 = sld [smem:[#allocation0]]
  $region30: #{tpu_custom_call.1} parent=0
    _
  %s8 = ssub.s32 1, %s6
  %s9 = scalar_select 0, %s8, %s6
  // Predicated region
  $region2: #{tpu_custom_call.1} parent=0 // pred_check
    _
  $region3: #{tpu_custom_call.1} parent=0 // pred_check_branch
    %11 = sbr.rel (0) target = $region5
  $region4: #{tpu_custom_call.1} parent=0 // pred_region
    _
  $region5: #{tpu_custom_call.1} parent=0 // pred_fallthru
    _
  // Predicated region
  $region6: #{tpu_custom_call.1} parent=0 // pred_check
    _
  $region7: #{tpu_custom_call.1} parent=0 // pred_check_branch
    %13 = sbr.rel (0) target = $region9
  $region8: #{tpu_custom_call.1} parent=0 // pred_region
    _
  $region9: #{tpu_custom_call.1} parent=0 // pred_fallthru
    _
  // Predicated region
  $region10: #{tpu_custom_call.1} parent=0 // pred_check
    _
  $region11: #{tpu_custom_call.1} parent=0 // pred_check_branch
    %15 = sbr.rel (0) target = $region13
  $region12: #{tpu_custom_call.1} parent=0 // pred_region
    _
  $region13: #{tpu_custom_call.1} parent=0 // pred_fallthru
    _
  // Predicated region
  $region14: #{tpu_custom_call.1} parent=0 // pred_check
    _
  $region15: #{tpu_custom_call.1} parent=0 // pred_check_branch
    %17 = sbr.rel (0) target = $region17
  $region16: #{tpu_custom_call.1} parent=0 // pred_region
    _
  $region17: #{tpu_custom_call.1} parent=0 // pred_fallthru
    _
  // Predicated region
  $region18: #{tpu_custom_call.1} parent=0 // pred_check
    _
  $region19: #{tpu_custom_call.1} parent=0 // pred_check_branch
    %19 = sbr.rel (0) target = $region21
  $region20: #{tpu_custom_call.1} parent=0 // pred_region
    _
  $region21: #{tpu_custom_call.1} parent=0 // pred_fallthru
    _
  %v21 = vlaneseq
  %v22 = vand.u32 %v21, 127
  %v23 = vld [vmem:[%s0] sm:$0xff]
  %24 = vset.pattern.permute.xlu0 0
  %25 = vperm.xlu0 %24, %v23
  %v26 = vpop.permute.xlu0 %25
  %vm27 = vcmp.eq.s32.totalorder %v22, %v26
  %v28 = vsel %vm27, 1, 0
  %v29 = vcvt.s32.f32 %v28
  %v30 = vpack.c.bf16 %v29, %v29
  %v31 = vld [vmem:[%s2] sm:$0xff]
  %v32 = vld [vmem:[%s2 + $0x8] sm:$0xff]
  %v33 = vld [vmem:[%s2 + $0x10] sm:$0xff]
  %v34 = vld [vmem:[%s2 + $0x18] sm:$0xff]
  %v35 = vld [vmem:[%s2 + $0x20] sm:$0xff]
  %v36 = vld [vmem:[%s2 + $0x28] sm:$0xff]
  %v37 = vld [vmem:[%s2 + $0x30] sm:$0xff]
  %v38 = vld [vmem:[%s2 + $0x38] sm:$0xff]
  %v39 = vld [vmem:[%s2 + $0x40] sm:$0xff]
  %v40 = vld [vmem:[%s2 + $0x48] sm:$0xff]
  %v41 = vld [vmem:[%s2 + $0x50] sm:$0xff]
  %v42 = vld [vmem:[%s2 + $0x58] sm:$0xff]
  %v43 = vld [vmem:[%s2 + $0x60] sm:$0xff]
  %v44 = vld [vmem:[%s2 + $0x68] sm:$0xff]
  %v45 = vld [vmem:[%s2 + $0x70] sm:$0xff]
  %v46 = vld [vmem:[%s2 + $0x78] sm:$0xff]
  %v47 = vld [vmem:[%s2 + $0x80] sm:$0xff]
  %v48 = vld [vmem:[%s2 + $0x88] sm:$0xff]
  %v49 = vld [vmem:[%s2 + $0x90] sm:$0xff]
  %v50 = vld [vmem:[%s2 + $0x98] sm:$0xff]
  %v51 = vld [vmem:[%s2 + $0xa0] sm:$0xff]
  %v52 = vld [vmem:[%s2 + $0xa8] sm:$0xff]
  %v53 = vld [vmem:[%s2 + $0xb0] sm:$0xff]
  %v54 = vld [vmem:[%s2 + $0xb8] sm:$0xff]
  %v55 = vld [vmem:[%s2 + $0xc0] sm:$0xff]
  %v56 = vld [vmem:[%s2 + $0xc8] sm:$0xff]
  %v57 = vld [vmem:[%s2 + $0xd0] sm:$0xff]
  %v58 = vld [vmem:[%s2 + $0xd8] sm:$0xff]
  %v59 = vld [vmem:[%s2 + $0xe0] sm:$0xff]
  %v60 = vld [vmem:[%s2 + $0xe8] sm:$0xff]
  %v61 = vld [vmem:[%s2 + $0xf0] sm:$0xff]
  %v62 = vld [vmem:[%s2 + $0xf8] sm:$0xff]
  %v63 = vld [vmem:[%s2 + $0x100] sm:$0xff]
  %v64 = vld [vmem:[%s2 + $0x108] sm:$0xff]
  %v65 = vld [vmem:[%s2 + $0x110] sm:$0xff]
  %v66 = vld [vmem:[%s2 + $0x118] sm:$0xff]
  %v67 = vld [vmem:[%s2 + $0x120] sm:$0xff]
  %v68 = vld [vmem:[%s2 + $0x128] sm:$0xff]
  %v69 = vld [vmem:[%s2 + $0x130] sm:$0xff]
  %v70 = vld [vmem:[%s2 + $0x138] sm:$0xff]
  %v71 = vld [vmem:[%s2 + $0x140] sm:$0xff]
  %v72 = vld [vmem:[%s2 + $0x148] sm:$0xff]
  %v73 = vld [vmem:[%s2 + $0x150] sm:$0xff]
  %v74 = vld [vmem:[%s2 + $0x158] sm:$0xff]
  %v75 = vld [vmem:[%s2 + $0x160] sm:$0xff]
  %v76 = vld [vmem:[%s2 + $0x168] sm:$0xff]
  %v77 = vld [vmem:[%s2 + $0x170] sm:$0xff]
  %v78 = vld [vmem:[%s2 + $0x178] sm:$0xff]
  %v127 = vunpack.c.l.b16 %v31
  %v128 = vunpack.c.h.b16 %v31
  %v129 = vunpack.c.l.b16 %v32
  %v130 = vunpack.c.h.b16 %v32
  %v131 = vunpack.c.l.b16 %v33
  %v132 = vunpack.c.h.b16 %v33
  %v133 = vunpack.c.l.b16 %v34
  %v134 = vunpack.c.h.b16 %v34
  %v135 = vunpack.c.l.b16 %v35
  %v136 = vunpack.c.h.b16 %v35
  %v137 = vunpack.c.l.b16 %v36
  %v138 = vunpack.c.h.b16 %v36
  %v139 = vunpack.c.l.b16 %v37
  %v140 = vunpack.c.h.b16 %v37
  %v141 = vunpack.c.l.b16 %v38
  %v142 = vunpack.c.h.b16 %v38
  %v143 = vunpack.c.l.b16 %v39
  %v144 = vunpack.c.h.b16 %v39
  %v145 = vunpack.c.l.b16 %v40
  %v146 = vunpack.c.h.b16 %v40
  %v147 = vunpack.c.l.b16 %v41
  %v148 = vunpack.c.h.b16 %v41
  %v149 = vunpack.c.l.b16 %v42
  %v150 = vunpack.c.h.b16 %v42
  %v151 = vunpack.c.l.b16 %v43
  %v152 = vunpack.c.h.b16 %v43
  %v153 = vunpack.c.l.b16 %v44
  %v154 = vunpack.c.h.b16 %v44
  %v155 = vunpack.c.l.b16 %v45
  %v156 = vunpack.c.h.b16 %v45
  %v157 = vunpack.c.l.b16 %v46
  %v158 = vunpack.c.h.b16 %v46
  %v159 = vunpack.c.l.b16 %v47
  %v160 = vunpack.c.h.b16 %v47
  %v161 = vunpack.c.l.b16 %v48
  %v162 = vunpack.c.h.b16 %v48
  %v163 = vunpack.c.l.b16 %v49
  %v164 = vunpack.c.h.b16 %v49
  %v165 = vunpack.c.l.b16 %v50
  %v166 = vunpack.c.h.b16 %v50
  %v167 = vunpack.c.l.b16 %v51
  %v168 = vunpack.c.h.b16 %v51
  %v169 = vunpack.c.l.b16 %v52
  %v170 = vunpack.c.h.b16 %v52
  %v171 = vunpack.c.l.b16 %v53
  %v172 = vunpack.c.h.b16 %v53
  %v173 = vunpack.c.l.b16 %v54
  %v174 = vunpack.c.h.b16 %v54
  %v175 = vunpack.c.l.b16 %v55
  %v176 = vunpack.c.h.b16 %v55
  %v177 = vunpack.c.l.b16 %v56
  %v178 = vunpack.c.h.b16 %v56
  %v179 = vunpack.c.l.b16 %v57
  %v180 = vunpack.c.h.b16 %v57
  %v181 = vunpack.c.l.b16 %v58
  %v182 = vunpack.c.h.b16 %v58
  %v183 = vunpack.c.l.b16 %v59
  %v184 = vunpack.c.h.b16 %v59
  %v185 = vunpack.c.l.b16 %v60
  %v186 = vunpack.c.h.b16 %v60
  %v187 = vunpack.c.l.b16 %v61
  %v188 = vunpack.c.h.b16 %v61
  %v189 = vunpack.c.l.b16 %v62
  %v190 = vunpack.c.h.b16 %v62
  %v191 = vunpack.c.l.b16 %v63
  %v192 = vunpack.c.h.b16 %v63
  %v193 = vunpack.c.l.b16 %v64
  %v194 = vunpack.c.h.b16 %v64
  %v195 = vunpack.c.l.b16 %v65
  %v196 = vunpack.c.h.b16 %v65
  %v197 = vunpack.c.l.b16 %v66
  %v198 = vunpack.c.h.b16 %v66
  %v199 = vunpack.c.l.b16 %v67
  %v200 = vunpack.c.h.b16 %v67
  %v201 = vunpack.c.l.b16 %v68
  %v202 = vunpack.c.h.b16 %v68
  %v203 = vunpack.c.l.b16 %v69
  %v204 = vunpack.c.h.b16 %v69
  %v205 = vunpack.c.l.b16 %v70
  %v206 = vunpack.c.h.b16 %v70
  %v207 = vunpack.c.l.b16 %v71
  %v208 = vunpack.c.h.b16 %v71
  %v209 = vunpack.c.l.b16 %v72
  %v210 = vunpack.c.h.b16 %v72
  %v211 = vunpack.c.l.b16 %v73
  %v212 = vunpack.c.h.b16 %v73
  %v213 = vunpack.c.l.b16 %v74
  %v214 = vunpack.c.h.b16 %v74
  %v215 = vunpack.c.l.b16 %v75
  %v216 = vunpack.c.h.b16 %v75
  %v217 = vunpack.c.l.b16 %v76
  %v218 = vunpack.c.h.b16 %v76
  %v219 = vunpack.c.l.b16 %v77
  %v220 = vunpack.c.h.b16 %v77
  %v221 = vunpack.c.l.b16 %v78
  %v222 = vunpack.c.h.b16 %v78
  %v223 = vpack.c.b16 %v139, %v127
  %v224 = vpack.c.b16 %v140, %v128
  %v225 = vpack.c.b16 %v141, %v129
  %v226 = vpack.c.b16 %v142, %v130
  %v227 = vpack.c.b16 %v143, %v131
  %v228 = vpack.c.b16 %v144, %v132
  %v229 = vpack.c.b16 %v145, %v133
  %v230 = vpack.c.b16 %v146, %v134
  %v231 = vpack.c.b16 %v147, %v135
  %v232 = vpack.c.b16 %v148, %v136
  %v233 = vpack.c.b16 %v149, %v137
  %v234 = vpack.c.b16 %v150, %v138
  %v235 = vpack.c.b16 %v163, %v151
  %v236 = vpack.c.b16 %v164, %v152
  %v237 = vpack.c.b16 %v165, %v153
  %v238 = vpack.c.b16 %v166, %v154
  %v239 = vpack.c.b16 %v167, %v155
  %v240 = vpack.c.b16 %v168, %v156
  %v241 = vpack.c.b16 %v169, %v157
  %v242 = vpack.c.b16 %v170, %v158
  %v243 = vpack.c.b16 %v171, %v159
  %v244 = vpack.c.b16 %v172, %v160
  %v245 = vpack.c.b16 %v173, %v161
  %v246 = vpack.c.b16 %v174, %v162
  %v247 = vpack.c.b16 %v187, %v175
  %v248 = vpack.c.b16 %v188, %v176
  %v249 = vpack.c.b16 %v189, %v177
  %v250 = vpack.c.b16 %v190, %v178
  %v251 = vpack.c.b16 %v191, %v179
  %v252 = vpack.c.b16 %v192, %v180
  %v253 = vpack.c.b16 %v193, %v181
  %v254 = vpack.c.b16 %v194, %v182
  %v255 = vpack.c.b16 %v195, %v183
  %v256 = vpack.c.b16 %v196, %v184
  %v257 = vpack.c.b16 %v197, %v185
  %v258 = vpack.c.b16 %v198, %v186
  %v259 = vpack.c.b16 %v211, %v199
  %v260 = vpack.c.b16 %v212, %v200
  %v261 = vpack.c.b16 %v213, %v201
  %v262 = vpack.c.b16 %v214, %v202
  %v263 = vpack.c.b16 %v215, %v203
  %v264 = vpack.c.b16 %v216, %v204
  %v265 = vpack.c.b16 %v217, %v205
  %v266 = vpack.c.b16 %v218, %v206
  %v267 = vpack.c.b16 %v219, %v207
  %v268 = vpack.c.b16 %v220, %v208
  %v269 = vpack.c.b16 %v221, %v209
  %v270 = vpack.c.b16 %v222, %v210
  %vm319 = vcmask 523264
  %v321 = vsel %vm319, %v30, 0
  %323 = vmatpush.bf16.msra.mxu0 0
  %324 = vmatpush.bf16.msra.mxu0 0
  %325 = vmatpush.bf16.msra.mxu0 0
  %326 = vmatpush.bf16.msra.mxu0 0
  %327 = vmatpush.bf16.msra.mxu0 %v259
  %328 = vmatpush.bf16.msra.mxu0 %v247
  %329 = vmatpush.bf16.msra.mxu0 %v235
  %330 = vmatpush.bf16.msra.mxu0 %v223
  %331 = vmatmul.bf16.gmra.mxu0 %v321
  %v332 = vpop.f32.mrf.mxu0
  %v333 = vadd.f32 0.0, %v332
  %v334 = vpop.f32.mrf.mxu0
  %335 = vdwg.mxu0
  %336 = vmatpush.bf16.msra.mxu0 0
  %337 = vmatpush.bf16.msra.mxu0 0
  %338 = vmatpush.bf16.msra.mxu0 0
  %339 = vmatpush.bf16.msra.mxu0 0
  %340 = vmatpush.bf16.msra.mxu0 %v260
  %341 = vmatpush.bf16.msra.mxu0 %v248
  %342 = vmatpush.bf16.msra.mxu0 %v236
  %343 = vmatpush.bf16.msra.mxu0 %v224
  %344 = vmatmul.bf16.gmra.mxu0 %v321
  %v345 = vpop.f32.mrf.mxu0
  %v346 = vadd.f32 0.0, %v345
  %v347 = vpop.f32.mrf.mxu0
  %348 = vdwg.mxu0
  %349 = vmatpush.bf16.msra.mxu0 0
  %350 = vmatpush.bf16.msra.mxu0 0
  %351 = vmatpush.bf16.msra.mxu0 0
  %352 = vmatpush.bf16.msra.mxu0 0
  %353 = vmatpush.bf16.msra.mxu0 %v261
  %354 = vmatpush.bf16.msra.mxu0 %v249
  %355 = vmatpush.bf16.msra.mxu0 %v237
  %356 = vmatpush.bf16.msra.mxu0 %v225
  %357 = vmatmul.bf16.gmra.mxu0 %v321
  %v358 = vpop.f32.mrf.mxu0
  %v359 = vadd.f32 0.0, %v358
  %v360 = vpop.f32.mrf.mxu0
  %361 = vdwg.mxu0
  %362 = vmatpush.bf16.msra.mxu0 0
  %363 = vmatpush.bf16.msra.mxu0 0
  %364 = vmatpush.bf16.msra.mxu0 0
  %365 = vmatpush.bf16.msra.mxu0 0
  %366 = vmatpush.bf16.msra.mxu0 %v262
  %367 = vmatpush.bf16.msra.mxu0 %v250
  %368 = vmatpush.bf16.msra.mxu0 %v238
  %369 = vmatpush.bf16.msra.mxu0 %v226
  %370 = vmatmul.bf16.gmra.mxu0 %v321
  %v371 = vpop.f32.mrf.mxu0
  %v372 = vadd.f32 0.0, %v371
  %v373 = vpop.f32.mrf.mxu0
  %374 = vdwg.mxu0
  %375 = vmatpush.bf16.msra.mxu0 0
  %376 = vmatpush.bf16.msra.mxu0 0
  %377 = vmatpush.bf16.msra.mxu0 0
  %378 = vmatpush.bf16.msra.mxu0 0
  %379 = vmatpush.bf16.msra.mxu0 %v263
  %380 = vmatpush.bf16.msra.mxu0 %v251
  %381 = vmatpush.bf16.msra.mxu0 %v239
  %382 = vmatpush.bf16.msra.mxu0 %v227
  %383 = vmatmul.bf16.gmra.mxu0 %v321
  %v384 = vpop.f32.mrf.mxu0
  %v385 = vadd.f32 0.0, %v384
  %v386 = vpop.f32.mrf.mxu0
  %387 = vdwg.mxu0
  %388 = vmatpush.bf16.msra.mxu0 0
  %389 = vmatpush.bf16.msra.mxu0 0
  %390 = vmatpush.bf16.msra.mxu0 0
  %391 = vmatpush.bf16.msra.mxu0 0
  %392 = vmatpush.bf16.msra.mxu0 %v264
  %393 = vmatpush.bf16.msra.mxu0 %v252
  %394 = vmatpush.bf16.msra.mxu0 %v240
  %395 = vmatpush.bf16.msra.mxu0 %v228
  %396 = vmatmul.bf16.gmra.mxu0 %v321
  %v397 = vpop.f32.mrf.mxu0
  %v398 = vadd.f32 0.0, %v397
  %v399 = vpop.f32.mrf.mxu0
  %400 = vdwg.mxu0
  %401 = vmatpush.bf16.msra.mxu0 0
  %402 = vmatpush.bf16.msra.mxu0 0
  %403 = vmatpush.bf16.msra.mxu0 0
  %404 = vmatpush.bf16.msra.mxu0 0
  %405 = vmatpush.bf16.msra.mxu0 %v265
  %406 = vmatpush.bf16.msra.mxu0 %v253
  %407 = vmatpush.bf16.msra.mxu0 %v241
  %408 = vmatpush.bf16.msra.mxu0 %v229
  %409 = vmatmul.bf16.gmra.mxu0 %v321
  %v410 = vpop.f32.mrf.mxu0
  %v411 = vadd.f32 0.0, %v410
  %v412 = vpop.f32.mrf.mxu0
  %413 = vdwg.mxu0
  %414 = vmatpush.bf16.msra.mxu0 0
  %415 = vmatpush.bf16.msra.mxu0 0
  %416 = vmatpush.bf16.msra.mxu0 0
  %417 = vmatpush.bf16.msra.mxu0 0
  %418 = vmatpush.bf16.msra.mxu0 %v266
  %419 = vmatpush.bf16.msra.mxu0 %v254
  %420 = vmatpush.bf16.msra.mxu0 %v242
  %421 = vmatpush.bf16.msra.mxu0 %v230
  %422 = vmatmul.bf16.gmra.mxu0 %v321
  %v423 = vpop.f32.mrf.mxu0
  %v424 = vadd.f32 0.0, %v423
  %v425 = vpop.f32.mrf.mxu0
  %426 = vdwg.mxu0
  %427 = vmatpush.bf16.msra.mxu0 0
  %428 = vmatpush.bf16.msra.mxu0 0
  %429 = vmatpush.bf16.msra.mxu0 0
  %430 = vmatpush.bf16.msra.mxu0 0
  %431 = vmatpush.bf16.msra.mxu0 %v267
  %432 = vmatpush.bf16.msra.mxu0 %v255
  %433 = vmatpush.bf16.msra.mxu0 %v243
  %434 = vmatpush.bf16.msra.mxu0 %v231
  %435 = vmatmul.bf16.gmra.mxu0 %v321
  %v436 = vpop.f32.mrf.mxu0
  %v437 = vadd.f32 0.0, %v436
  %v438 = vpop.f32.mrf.mxu0
  %439 = vdwg.mxu0
  %440 = vmatpush.bf16.msra.mxu0 0
  %441 = vmatpush.bf16.msra.mxu0 0
  %442 = vmatpush.bf16.msra.mxu0 0
  %443 = vmatpush.bf16.msra.mxu0 0
  %444 = vmatpush.bf16.msra.mxu0 %v268
  %445 = vmatpush.bf16.msra.mxu0 %v256
  %446 = vmatpush.bf16.msra.mxu0 %v244
  %447 = vmatpush.bf16.msra.mxu0 %v232
  %448 = vmatmul.bf16.gmra.mxu0 %v321
  %v449 = vpop.f32.mrf.mxu0
  %v450 = vadd.f32 0.0, %v449
  %v451 = vpop.f32.mrf.mxu0
  %452 = vdwg.mxu0
  %453 = vmatpush.bf16.msra.mxu0 0
  %454 = vmatpush.bf16.msra.mxu0 0
  %455 = vmatpush.bf16.msra.mxu0 0
  %456 = vmatpush.bf16.msra.mxu0 0
  %457 = vmatpush.bf16.msra.mxu0 %v269
  %458 = vmatpush.bf16.msra.mxu0 %v257
  %459 = vmatpush.bf16.msra.mxu0 %v245
  %460 = vmatpush.bf16.msra.mxu0 %v233
  %461 = vmatmul.bf16.gmra.mxu0 %v321
  %v462 = vpop.f32.mrf.mxu0
  %v463 = vadd.f32 0.0, %v462
  %v464 = vpop.f32.mrf.mxu0
  %465 = vdwg.mxu0
  %466 = vmatpush.bf16.msra.mxu0 0
  %467 = vmatpush.bf16.msra.mxu0 0
  %468 = vmatpush.bf16.msra.mxu0 0
  %469 = vmatpush.bf16.msra.mxu0 0
  %470 = vmatpush.bf16.msra.mxu0 %v270
  %471 = vmatpush.bf16.msra.mxu0 %v258
  %472 = vmatpush.bf16.msra.mxu0 %v246
  %473 = vmatpush.bf16.msra.mxu0 %v234
  %474 = vmatmul.bf16.gmra.mxu0 %v321
  %v475 = vpop.f32.mrf.mxu0
  %v476 = vadd.f32 0.0, %v475
  %v477 = vpop.f32.mrf.mxu0
  %478 = vdwg.mxu0
  %v479 = vld [vmem:[%s1] sm:$0xff]
  %481 = vset.pattern.permute.xlu0 0
  %482 = vperm.xlu0 %481, %v479
  %v483 = vpop.permute.xlu0 %482
  %v485 = vmul.f32 %v333, %v483
  %v486 = vmul.f32 %v346, %v483
  %v487 = vmul.f32 %v359, %v483
  %v488 = vmul.f32 %v372, %v483
  %v489 = vmul.f32 %v385, %v483
  %v490 = vmul.f32 %v398, %v483
  %v491 = vmul.f32 %v411, %v483
  %v492 = vmul.f32 %v424, %v483
  %v493 = vmul.f32 %v437, %v483
  %v494 = vmul.f32 %v450, %v483
  %v495 = vmul.f32 %v463, %v483
  %v496 = vmul.f32 %v476, %v483
  %v497 = vpack.c.bf16 %v485, %v485
  %v498 = vpack.c.bf16 %v486, %v486
  %v499 = vpack.c.bf16 %v487, %v487
  %v500 = vpack.c.bf16 %v488, %v488
  %v501 = vpack.c.bf16 %v489, %v489
  %v502 = vpack.c.bf16 %v490, %v490
  %v503 = vpack.c.bf16 %v491, %v491
  %v504 = vpack.c.bf16 %v492, %v492
  %v505 = vpack.c.bf16 %v493, %v493
  %v506 = vpack.c.bf16 %v494, %v494
  %v507 = vpack.c.bf16 %v495, %v495
  %v508 = vpack.c.bf16 %v496, %v496
  %v509 = vld [vmem:[%s3] sm:$0xf]
  %v510 = vld [vmem:[%s3 + $0x4] sm:$0xf]
  %v511 = vld [vmem:[%s3 + $0x8] sm:$0xf]
  %v512 = vld [vmem:[%s3 + $0xc] sm:$0xf]
  %v513 = vld [vmem:[%s3 + $0x10] sm:$0xf]
  %v514 = vld [vmem:[%s3 + $0x14] sm:$0xf]
  %v515 = vld [vmem:[%s3 + $0x18] sm:$0xf]
  %v516 = vld [vmem:[%s3 + $0x1c] sm:$0xf]
  %v517 = vld [vmem:[%s3 + $0x20] sm:$0xf]
  %v518 = vld [vmem:[%s3 + $0x24] sm:$0xf]
  %v519 = vld [vmem:[%s3 + $0x28] sm:$0xf]
  %v520 = vld [vmem:[%s3 + $0x2c] sm:$0xf]
  %v521 = vld [vmem:[%s3 + $0x30] sm:$0xf]
  %v522 = vld [vmem:[%s3 + $0x34] sm:$0xf]
  %v523 = vld [vmem:[%s3 + $0x38] sm:$0xf]
  %v524 = vld [vmem:[%s3 + $0x3c] sm:$0xf]
  %v525 = vld [vmem:[%s3 + $0x40] sm:$0xf]
  %v526 = vld [vmem:[%s3 + $0x44] sm:$0xf]
  %v527 = vld [vmem:[%s3 + $0x48] sm:$0xf]
  %v528 = vld [vmem:[%s3 + $0x4c] sm:$0xf]
  %v529 = vld [vmem:[%s3 + $0x50] sm:$0xf]
  %v530 = vld [vmem:[%s3 + $0x54] sm:$0xf]
  %v531 = vld [vmem:[%s3 + $0x58] sm:$0xf]
  %v532 = vld [vmem:[%s3 + $0x5c] sm:$0xf]
  %v533 = vld [vmem:[%s3 + $0x60] sm:$0xf]
  %v534 = vld [vmem:[%s3 + $0x64] sm:$0xf]
  %v535 = vld [vmem:[%s3 + $0x68] sm:$0xf]
  %v536 = vld [vmem:[%s3 + $0x6c] sm:$0xf]
  %v537 = vld [vmem:[%s3 + $0x70] sm:$0xf]
  %v538 = vld [vmem:[%s3 + $0x74] sm:$0xf]
  %v539 = vld [vmem:[%s3 + $0x78] sm:$0xf]
  %v540 = vld [vmem:[%s3 + $0x7c] sm:$0xf]
  %v541 = vld [vmem:[%s3 + $0x80] sm:$0xf]
  %v542 = vld [vmem:[%s3 + $0x84] sm:$0xf]
  %v543 = vld [vmem:[%s3 + $0x88] sm:$0xf]
  %v544 = vld [vmem:[%s3 + $0x8c] sm:$0xf]
  %v545 = vld [vmem:[%s3 + $0x90] sm:$0xf]
  %v546 = vld [vmem:[%s3 + $0x94] sm:$0xf]
  %v547 = vld [vmem:[%s3 + $0x98] sm:$0xf]
  %v548 = vld [vmem:[%s3 + $0x9c] sm:$0xf]
  %v549 = vld [vmem:[%s3 + $0xa0] sm:$0xf]
  %v550 = vld [vmem:[%s3 + $0xa4] sm:$0xf]
  %v551 = vld [vmem:[%s3 + $0xa8] sm:$0xf]
  %v552 = vld [vmem:[%s3 + $0xac] sm:$0xf]
  %v553 = vld [vmem:[%s3 + $0xb0] sm:$0xf]
  %v554 = vld [vmem:[%s3 + $0xb4] sm:$0xf]
  %v555 = vld [vmem:[%s3 + $0xb8] sm:$0xf]
  %v556 = vld [vmem:[%s3 + $0xbc] sm:$0xf]
  %v557 = vld [vmem:[%s3 + $0xc0] sm:$0xf]
  %v558 = vld [vmem:[%s3 + $0xc4] sm:$0xf]
  %v559 = vld [vmem:[%s3 + $0xc8] sm:$0xf]
  %v560 = vld [vmem:[%s3 + $0xcc] sm:$0xf]
  %v561 = vld [vmem:[%s3 + $0xd0] sm:$0xf]
  %v562 = vld [vmem:[%s3 + $0xd4] sm:$0xf]
  %v563 = vld [vmem:[%s3 + $0xd8] sm:$0xf]
  %v564 = vld [vmem:[%s3 + $0xdc] sm:$0xf]
  %v565 = vld [vmem:[%s3 + $0xe0] sm:$0xf]
  %v566 = vld [vmem:[%s3 + $0xe4] sm:$0xf]
  %v567 = vld [vmem:[%s3 + $0xe8] sm:$0xf]
  %v568 = vld [vmem:[%s3 + $0xec] sm:$0xf]
  %v569 = vld [vmem:[%s3 + $0xf0] sm:$0xf]
  %v570 = vld [vmem:[%s3 + $0xf4] sm:$0xf]
  %v571 = vld [vmem:[%s3 + $0xf8] sm:$0xf]
  %v572 = vld [vmem:[%s3 + $0xfc] sm:$0xf]
  %v573 = vld [vmem:[%s3 + $0x100] sm:$0xf]
  %v574 = vld [vmem:[%s3 + $0x104] sm:$0xf]
  %v575 = vld [vmem:[%s3 + $0x108] sm:$0xf]
  %v576 = vld [vmem:[%s3 + $0x10c] sm:$0xf]
  %v577 = vld [vmem:[%s3 + $0x110] sm:$0xf]
  %v578 = vld [vmem:[%s3 + $0x114] sm:$0xf]
  %v579 = vld [vmem:[%s3 + $0x118] sm:$0xf]
  %v580 = vld [vmem:[%s3 + $0x11c] sm:$0xf]
  %v581 = vld [vmem:[%s3 + $0x120] sm:$0xf]
  %v582 = vld [vmem:[%s3 + $0x124] sm:$0xf]
  %v583 = vld [vmem:[%s3 + $0x128] sm:$0xf]
  %v584 = vld [vmem:[%s3 + $0x12c] sm:$0xf]
  %v585 = vld [vmem:[%s3 + $0x130] sm:$0xf]
  %v586 = vld [vmem:[%s3 + $0x134] sm:$0xf]
  %v587 = vld [vmem:[%s3 + $0x138] sm:$0xf]
  %v588 = vld [vmem:[%s3 + $0x13c] sm:$0xf]
  %v589 = vld [vmem:[%s3 + $0x140] sm:$0xf]
  %v590 = vld [vmem:[%s3 + $0x144] sm:$0xf]
  %v591 = vld [vmem:[%s3 + $0x148] sm:$0xf]
  %v592 = vld [vmem:[%s3 + $0x14c] sm:$0xf]
  %v593 = vld [vmem:[%s3 + $0x150] sm:$0xf]
  %v594 = vld [vmem:[%s3 + $0x154] sm:$0xf]
  %v595 = vld [vmem:[%s3 + $0x158] sm:$0xf]
  %v596 = vld [vmem:[%s3 + $0x15c] sm:$0xf]
  %v597 = vld [vmem:[%s3 + $0x160] sm:$0xf]
  %v598 = vld [vmem:[%s3 + $0x164] sm:$0xf]
  %v599 = vld [vmem:[%s3 + $0x168] sm:$0xf]
  %v600 = vld [vmem:[%s3 + $0x16c] sm:$0xf]
  %v601 = vld [vmem:[%s3 + $0x170] sm:$0xf]
  %v602 = vld [vmem:[%s3 + $0x174] sm:$0xf]
  %v603 = vld [vmem:[%s3 + $0x178] sm:$0xf]
  %v604 = vld [vmem:[%s3 + $0x17c] sm:$0xf]
  %v605 = vld [vmem:[%s3 + $0x180] sm:$0xf]
  %v606 = vld [vmem:[%s3 + $0x184] sm:$0xf]
  %v607 = vld [vmem:[%s3 + $0x188] sm:$0xf]
  %v608 = vld [vmem:[%s3 + $0x18c] sm:$0xf]
  %v609 = vld [vmem:[%s3 + $0x190] sm:$0xf]
  %v610 = vld [vmem:[%s3 + $0x194] sm:$0xf]
  %v611 = vld [vmem:[%s3 + $0x198] sm:$0xf]
  %v612 = vld [vmem:[%s3 + $0x19c] sm:$0xf]
  %v613 = vld [vmem:[%s3 + $0x1a0] sm:$0xf]
  %v614 = vld [vmem:[%s3 + $0x1a4] sm:$0xf]
  %v615 = vld [vmem:[%s3 + $0x1a8] sm:$0xf]
  %v616 = vld [vmem:[%s3 + $0x1ac] sm:$0xf]
  %v617 = vld [vmem:[%s3 + $0x1b0] sm:$0xf]
  %v618 = vld [vmem:[%s3 + $0x1b4] sm:$0xf]
  %v619 = vld [vmem:[%s3 + $0x1b8] sm:$0xf]
  %v620 = vld [vmem:[%s3 + $0x1bc] sm:$0xf]
  %v621 = vld [vmem:[%s3 + $0x1c0] sm:$0xf]
  %v622 = vld [vmem:[%s3 + $0x1c4] sm:$0xf]
  %v623 = vld [vmem:[%s3 + $0x1c8] sm:$0xf]
  %v624 = vld [vmem:[%s3 + $0x1cc] sm:$0xf]
  %v625 = vld [vmem:[%s3 + $0x1d0] sm:$0xf]
  %v626 = vld [vmem:[%s3 + $0x1d4] sm:$0xf]
  %v627 = vld [vmem:[%s3 + $0x1d8] sm:$0xf]
  %v628 = vld [vmem:[%s3 + $0x1dc] sm:$0xf]
  %v629 = vld [vmem:[%s3 + $0x1e0] sm:$0xf]
  %v630 = vld [vmem:[%s3 + $0x1e4] sm:$0xf]
  %v631 = vld [vmem:[%s3 + $0x1e8] sm:$0xf]
  %v632 = vld [vmem:[%s3 + $0x1ec] sm:$0xf]
  %v633 = vld [vmem:[%s3 + $0x1f0] sm:$0xf]
  %v634 = vld [vmem:[%s3 + $0x1f4] sm:$0xf]
  %v635 = vld [vmem:[%s3 + $0x1f8] sm:$0xf]
  %v636 = vld [vmem:[%s3 + $0x1fc] sm:$0xf]
  %v637 = vld [vmem:[%s3 + $0x200] sm:$0xf]
  %v638 = vld [vmem:[%s3 + $0x204] sm:$0xf]
  %v639 = vld [vmem:[%s3 + $0x208] sm:$0xf]
  %v640 = vld [vmem:[%s3 + $0x20c] sm:$0xf]
  %v641 = vld [vmem:[%s3 + $0x210] sm:$0xf]
  %v642 = vld [vmem:[%s3 + $0x214] sm:$0xf]
  %v643 = vld [vmem:[%s3 + $0x218] sm:$0xf]
  %v644 = vld [vmem:[%s3 + $0x21c] sm:$0xf]
  %v645 = vld [vmem:[%s3 + $0x220] sm:$0xf]
  %v646 = vld [vmem:[%s3 + $0x224] sm:$0xf]
  %v647 = vld [vmem:[%s3 + $0x228] sm:$0xf]
  %v648 = vld [vmem:[%s3 + $0x22c] sm:$0xf]
  %v649 = vld [vmem:[%s3 + $0x230] sm:$0xf]
  %v650 = vld [vmem:[%s3 + $0x234] sm:$0xf]
  %v651 = vld [vmem:[%s3 + $0x238] sm:$0xf]
  %v652 = vld [vmem:[%s3 + $0x23c] sm:$0xf]
  %v653 = vld [vmem:[%s3 + $0x240] sm:$0xf]
  %v654 = vld [vmem:[%s3 + $0x244] sm:$0xf]
  %v655 = vld [vmem:[%s3 + $0x248] sm:$0xf]
  %v656 = vld [vmem:[%s3 + $0x24c] sm:$0xf]
  %v657 = vld [vmem:[%s3 + $0x250] sm:$0xf]
  %v658 = vld [vmem:[%s3 + $0x254] sm:$0xf]
  %v659 = vld [vmem:[%s3 + $0x258] sm:$0xf]
  %v660 = vld [vmem:[%s3 + $0x25c] sm:$0xf]
  %v661 = vld [vmem:[%s3 + $0x260] sm:$0xf]
  %v662 = vld [vmem:[%s3 + $0x264] sm:$0xf]
  %v663 = vld [vmem:[%s3 + $0x268] sm:$0xf]
  %v664 = vld [vmem:[%s3 + $0x26c] sm:$0xf]
  %v665 = vld [vmem:[%s3 + $0x270] sm:$0xf]
  %v666 = vld [vmem:[%s3 + $0x274] sm:$0xf]
  %v667 = vld [vmem:[%s3 + $0x278] sm:$0xf]
  %v668 = vld [vmem:[%s3 + $0x27c] sm:$0xf]
  %v669 = vld [vmem:[%s3 + $0x280] sm:$0xf]
  %v670 = vld [vmem:[%s3 + $0x284] sm:$0xf]
  %v671 = vld [vmem:[%s3 + $0x288] sm:$0xf]
  %v672 = vld [vmem:[%s3 + $0x28c] sm:$0xf]
  %v673 = vld [vmem:[%s3 + $0x290] sm:$0xf]
  %v674 = vld [vmem:[%s3 + $0x294] sm:$0xf]
  %v675 = vld [vmem:[%s3 + $0x298] sm:$0xf]
  %v676 = vld [vmem:[%s3 + $0x29c] sm:$0xf]
  %v677 = vld [vmem:[%s3 + $0x2a0] sm:$0xf]
  %v678 = vld [vmem:[%s3 + $0x2a4] sm:$0xf]
  %v679 = vld [vmem:[%s3 + $0x2a8] sm:$0xf]
  %v680 = vld [vmem:[%s3 + $0x2ac] sm:$0xf]
  %v681 = vld [vmem:[%s3 + $0x2b0] sm:$0xf]
  %v682 = vld [vmem:[%s3 + $0x2b4] sm:$0xf]
  %v683 = vld [vmem:[%s3 + $0x2b8] sm:$0xf]
  %v684 = vld [vmem:[%s3 + $0x2bc] sm:$0xf]
  %v685 = vld [vmem:[%s3 + $0x2c0] sm:$0xf]
  %v686 = vld [vmem:[%s3 + $0x2c4] sm:$0xf]
  %v687 = vld [vmem:[%s3 + $0x2c8] sm:$0xf]
  %v688 = vld [vmem:[%s3 + $0x2cc] sm:$0xf]
  %v689 = vld [vmem:[%s3 + $0x2d0] sm:$0xf]
  %v690 = vld [vmem:[%s3 + $0x2d4] sm:$0xf]
  %v691 = vld [vmem:[%s3 + $0x2d8] sm:$0xf]
  %v692 = vld [vmem:[%s3 + $0x2dc] sm:$0xf]
  %v693 = vld [vmem:[%s3 + $0x2e0] sm:$0xf]
  %v694 = vld [vmem:[%s3 + $0x2e4] sm:$0xf]
  %v695 = vld [vmem:[%s3 + $0x2e8] sm:$0xf]
  %v696 = vld [vmem:[%s3 + $0x2ec] sm:$0xf]
  %v697 = vld [vmem:[%s3 + $0x2f0] sm:$0xf]
  %v698 = vld [vmem:[%s3 + $0x2f4] sm:$0xf]
  %v699 = vld [vmem:[%s3 + $0x2f8] sm:$0xf]
  %v700 = vld [vmem:[%s3 + $0x2fc] sm:$0xf]
  %v701 = vld [vmem:[%s4] sm:$0x1]
  %v703 = vperm.slane %v701, 0
  %v897 = vunpack.c.l.b16 %v509
  %v898 = vunpack.c.l.b16 %v510
  %v899 = vunpack.c.l.b16 %v511
  %v900 = vunpack.c.l.b16 %v512
  %v901 = vunpack.c.l.b16 %v513
  %v902 = vunpack.c.l.b16 %v514
  %v903 = vunpack.c.l.b16 %v515
  %v904 = vunpack.c.l.b16 %v516
  %v905 = vunpack.c.l.b16 %v517
  %v906 = vunpack.c.l.b16 %v518
  %v907 = vunpack.c.l.b16 %v519
  %v908 = vunpack.c.l.b16 %v520
  %v909 = vunpack.c.l.b16 %v521
  %v910 = vunpack.c.l.b16 %v522
  %v911 = vunpack.c.l.b16 %v523
  %v912 = vunpack.c.l.b16 %v524
  %v913 = vunpack.c.l.b16 %v525
  %v914 = vunpack.c.l.b16 %v526
  %v915 = vunpack.c.l.b16 %v527
  %v916 = vunpack.c.l.b16 %v528
  %v917 = vunpack.c.l.b16 %v529
  %v918 = vunpack.c.l.b16 %v530
  %v919 = vunpack.c.l.b16 %v531
  %v920 = vunpack.c.l.b16 %v532
  %v921 = vunpack.c.l.b16 %v533
  %v922 = vunpack.c.l.b16 %v534
  %v923 = vunpack.c.l.b16 %v535
  %v924 = vunpack.c.l.b16 %v536
  %v925 = vunpack.c.l.b16 %v537
  %v926 = vunpack.c.l.b16 %v538
  %v927 = vunpack.c.l.b16 %v539
  %v928 = vunpack.c.l.b16 %v540
  %v929 = vunpack.c.l.b16 %v541
  %v930 = vunpack.c.l.b16 %v542
  %v931 = vunpack.c.l.b16 %v543
  %v932 = vunpack.c.l.b16 %v544
  %v933 = vunpack.c.l.b16 %v545
  %v934 = vunpack.c.l.b16 %v546
  %v935 = vunpack.c.l.b16 %v547
  %v936 = vunpack.c.l.b16 %v548
  %v937 = vunpack.c.l.b16 %v549
  %v938 = vunpack.c.l.b16 %v550
  %v939 = vunpack.c.l.b16 %v551
  %v940 = vunpack.c.l.b16 %v552
  %v941 = vunpack.c.l.b16 %v553
  %v942 = vunpack.c.l.b16 %v554
  %v943 = vunpack.c.l.b16 %v555
  %v944 = vunpack.c.l.b16 %v556
  %v945 = vunpack.c.l.b16 %v557
  %v946 = vunpack.c.l.b16 %v558
  %v947 = vunpack.c.l.b16 %v559
  %v948 = vunpack.c.l.b16 %v560
  %v949 = vunpack.c.l.b16 %v561
  %v950 = vunpack.c.l.b16 %v562
  %v951 = vunpack.c.l.b16 %v563
  %v952 = vunpack.c.l.b16 %v564
  %v953 = vunpack.c.l.b16 %v565
  %v954 = vunpack.c.l.b16 %v566
  %v955 = vunpack.c.l.b16 %v567
  %v956 = vunpack.c.l.b16 %v568
  %v957 = vunpack.c.l.b16 %v569
  %v958 = vunpack.c.l.b16 %v570
  %v959 = vunpack.c.l.b16 %v571
  %v960 = vunpack.c.l.b16 %v572
  %v961 = vunpack.c.l.b16 %v573
  %v962 = vunpack.c.l.b16 %v574
  %v963 = vunpack.c.l.b16 %v575
  %v964 = vunpack.c.l.b16 %v576
  %v965 = vunpack.c.l.b16 %v577
  %v966 = vunpack.c.l.b16 %v578
  %v967 = vunpack.c.l.b16 %v579
  %v968 = vunpack.c.l.b16 %v580
  %v969 = vunpack.c.l.b16 %v581
  %v970 = vunpack.c.l.b16 %v582
  %v971 = vunpack.c.l.b16 %v583
  %v972 = vunpack.c.l.b16 %v584
  %v973 = vunpack.c.l.b16 %v585
  %v974 = vunpack.c.l.b16 %v586
  %v975 = vunpack.c.l.b16 %v587
  %v976 = vunpack.c.l.b16 %v588
  %v977 = vunpack.c.l.b16 %v589
  %v978 = vunpack.c.l.b16 %v590
  %v979 = vunpack.c.l.b16 %v591
  %v980 = vunpack.c.l.b16 %v592
  %v981 = vunpack.c.l.b16 %v593
  %v982 = vunpack.c.l.b16 %v594
  %v983 = vunpack.c.l.b16 %v595
  %v984 = vunpack.c.l.b16 %v596
  %v985 = vunpack.c.l.b16 %v597
  %v986 = vunpack.c.l.b16 %v598
  %v987 = vunpack.c.l.b16 %v599
  %v988 = vunpack.c.l.b16 %v600
  %v989 = vunpack.c.l.b16 %v601
  %v990 = vunpack.c.l.b16 %v602
  %v991 = vunpack.c.l.b16 %v603
  %v992 = vunpack.c.l.b16 %v604
  %v993 = vunpack.c.l.b16 %v605
  %v994 = vunpack.c.l.b16 %v606
  %v995 = vunpack.c.l.b16 %v607
  %v996 = vunpack.c.l.b16 %v608
  %v997 = vunpack.c.l.b16 %v609
  %v998 = vunpack.c.l.b16 %v610
  %v999 = vunpack.c.l.b16 %v611
  %v1000 = vunpack.c.l.b16 %v612
  %v1001 = vunpack.c.l.b16 %v613
  %v1002 = vunpack.c.l.b16 %v614
  %v1003 = vunpack.c.l.b16 %v615
  %v1004 = vunpack.c.l.b16 %v616
  %v1005 = vunpack.c.l.b16 %v617
  %v1006 = vunpack.c.l.b16 %v618
  %v1007 = vunpack.c.l.b16 %v619
  %v1008 = vunpack.c.l.b16 %v620
  %v1009 = vunpack.c.l.b16 %v621
  %v1010 = vunpack.c.l.b16 %v622
  %v1011 = vunpack.c.l.b16 %v623
  %v1012 = vunpack.c.l.b16 %v624
  %v1013 = vunpack.c.l.b16 %v625
  %v1014 = vunpack.c.l.b16 %v626
  %v1015 = vunpack.c.l.b16 %v627
  %v1016 = vunpack.c.l.b16 %v628
  %v1017 = vunpack.c.l.b16 %v629
  %v1018 = vunpack.c.l.b16 %v630
  %v1019 = vunpack.c.l.b16 %v631
  %v1020 = vunpack.c.l.b16 %v632
  %v1021 = vunpack.c.l.b16 %v633
  %v1022 = vunpack.c.l.b16 %v634
  %v1023 = vunpack.c.l.b16 %v635
  %v1024 = vunpack.c.l.b16 %v636
  %v1025 = vunpack.c.l.b16 %v637
  %v1026 = vunpack.c.l.b16 %v638
  %v1027 = vunpack.c.l.b16 %v639
  %v1028 = vunpack.c.l.b16 %v640
  %v1029 = vunpack.c.l.b16 %v641
  %v1030 = vunpack.c.l.b16 %v642
  %v1031 = vunpack.c.l.b16 %v643
  %v1032 = vunpack.c.l.b16 %v644
  %v1033 = vunpack.c.l.b16 %v645
  %v1034 = vunpack.c.l.b16 %v646
  %v1035 = vunpack.c.l.b16 %v647
  %v1036 = vunpack.c.l.b16 %v648
  %v1037 = vunpack.c.l.b16 %v649
  %v1038 = vunpack.c.l.b16 %v650
  %v1039 = vunpack.c.l.b16 %v651
  %v1040 = vunpack.c.l.b16 %v652
  %v1041 = vunpack.c.l.b16 %v653
  %v1042 = vunpack.c.l.b16 %v654
  %v1043 = vunpack.c.l.b16 %v655
  %v1044 = vunpack.c.l.b16 %v656
  %v1045 = vunpack.c.l.b16 %v657
  %v1046 = vunpack.c.l.b16 %v658
  %v1047 = vunpack.c.l.b16 %v659
  %v1048 = vunpack.c.l.b16 %v660
  %v1049 = vunpack.c.l.b16 %v661
  %v1050 = vunpack.c.l.b16 %v662
  %v1051 = vunpack.c.l.b16 %v663
  %v1052 = vunpack.c.l.b16 %v664
  %v1053 = vunpack.c.l.b16 %v665
  %v1054 = vunpack.c.l.b16 %v666
  %v1055 = vunpack.c.l.b16 %v667
  %v1056 = vunpack.c.l.b16 %v668
  %v1057 = vunpack.c.l.b16 %v669
  %v1058 = vunpack.c.l.b16 %v670
  %v1059 = vunpack.c.l.b16 %v671
  %v1060 = vunpack.c.l.b16 %v672
  %v1061 = vunpack.c.l.b16 %v673
  %v1062 = vunpack.c.l.b16 %v674
  %v1063 = vunpack.c.l.b16 %v675
  %v1064 = vunpack.c.l.b16 %v676
  %v1065 = vunpack.c.l.b16 %v677
  %v1066 = vunpack.c.l.b16 %v678
  %v1067 = vunpack.c.l.b16 %v679
  %v1068 = vunpack.c.l.b16 %v680
  %v1069 = vunpack.c.l.b16 %v681
  %v1070 = vunpack.c.l.b16 %v682
  %v1071 = vunpack.c.l.b16 %v683
  %v1072 = vunpack.c.l.b16 %v684
  %v1073 = vunpack.c.l.b16 %v685
  %v1074 = vunpack.c.l.b16 %v686
  %v1075 = vunpack.c.l.b16 %v687
  %v1076 = vunpack.c.l.b16 %v688
  %v1077 = vunpack.c.l.b16 %v689
  %v1078 = vunpack.c.l.b16 %v690
  %v1079 = vunpack.c.l.b16 %v691
  %v1080 = vunpack.c.l.b16 %v692
  %v1081 = vunpack.c.l.b16 %v693
  %v1082 = vunpack.c.l.b16 %v694
  %v1083 = vunpack.c.l.b16 %v695
  %v1084 = vunpack.c.l.b16 %v696
  %v1085 = vunpack.c.l.b16 %v697
  %v1086 = vunpack.c.l.b16 %v698
  %v1087 = vunpack.c.l.b16 %v699
  %v1088 = vunpack.c.l.b16 %v700
  %v1089 = vpack.c.b16 %v898, %v897
  %v1090 = vpack.c.b16 %v900, %v899
  %v1091 = vpack.c.b16 %v902, %v901
  %v1092 = vpack.c.b16 %v904, %v903
  %v1093 = vpack.c.b16 %v906, %v905
  %v1094 = vpack.c.b16 %v908, %v907
  %v1095 = vpack.c.b16 %v910, %v909
  %v1096 = vpack.c.b16 %v912, %v911
  %v1097 = vpack.c.b16 %v914, %v913
  %v1098 = vpack.c.b16 %v916, %v915
  %v1099 = vpack.c.b16 %v918, %v917
  %v1100 = vpack.c.b16 %v920, %v919
  %v1101 = vpack.c.b16 %v922, %v921
  %v1102 = vpack.c.b16 %v924, %v923
  %v1103 = vpack.c.b16 %v926, %v925
  %v1104 = vpack.c.b16 %v928, %v927
  %v1105 = vpack.c.b16 %v930, %v929
  %v1106 = vpack.c.b16 %v932, %v931
  %v1107 = vpack.c.b16 %v934, %v933
  %v1108 = vpack.c.b16 %v936, %v935
  %v1109 = vpack.c.b16 %v938, %v937
  %v1110 = vpack.c.b16 %v940, %v939
  %v1111 = vpack.c.b16 %v942, %v941
  %v1112 = vpack.c.b16 %v944, %v943
  %v1113 = vpack.c.b16 %v946, %v945
  %v1114 = vpack.c.b16 %v948, %v947
  %v1115 = vpack.c.b16 %v950, %v949
  %v1116 = vpack.c.b16 %v952, %v951
  %v1117 = vpack.c.b16 %v954, %v953
  %v1118 = vpack.c.b16 %v956, %v955
  %v1119 = vpack.c.b16 %v958, %v957
  %v1120 = vpack.c.b16 %v960, %v959
  %v1121 = vpack.c.b16 %v962, %v961
  %v1122 = vpack.c.b16 %v964, %v963
  %v1123 = vpack.c.b16 %v966, %v965
  %v1124 = vpack.c.b16 %v968, %v967
  %v1125 = vpack.c.b16 %v970, %v969
  %v1126 = vpack.c.b16 %v972, %v971
  %v1127 = vpack.c.b16 %v974, %v973
  %v1128 = vpack.c.b16 %v976, %v975
  %v1129 = vpack.c.b16 %v978, %v977
  %v1130 = vpack.c.b16 %v980, %v979
  %v1131 = vpack.c.b16 %v982, %v981
  %v1132 = vpack.c.b16 %v984, %v983
  %v1133 = vpack.c.b16 %v986, %v985
  %v1134 = vpack.c.b16 %v988, %v987
  %v1135 = vpack.c.b16 %v990, %v989
  %v1136 = vpack.c.b16 %v992, %v991
  %v1137 = vpack.c.b16 %v994, %v993
  %v1138 = vpack.c.b16 %v996, %v995
  %v1139 = vpack.c.b16 %v998, %v997
  %v1140 = vpack.c.b16 %v1000, %v999
  %v1141 = vpack.c.b16 %v1002, %v1001
  %v1142 = vpack.c.b16 %v1004, %v1003
  %v1143 = vpack.c.b16 %v1006, %v1005
  %v1144 = vpack.c.b16 %v1008, %v1007
  %v1145 = vpack.c.b16 %v1010, %v1009
  %v1146 = vpack.c.b16 %v1012, %v1011
  %v1147 = vpack.c.b16 %v1014, %v1013
  %v1148 = vpack.c.b16 %v1016, %v1015
  %v1149 = vpack.c.b16 %v1018, %v1017
  %v1150 = vpack.c.b16 %v1020, %v1019
  %v1151 = vpack.c.b16 %v1022, %v1021
  %v1152 = vpack.c.b16 %v1024, %v1023
  %v1153 = vpack.c.b16 %v1026, %v1025
  %v1154 = vpack.c.b16 %v1028, %v1027
  %v1155 = vpack.c.b16 %v1030, %v1029
  %v1156 = vpack.c.b16 %v1032, %v1031
  %v1157 = vpack.c.b16 %v1034, %v1033
  %v1158 = vpack.c.b16 %v1036, %v1035
  %v1159 = vpack.c.b16 %v1038, %v1037
  %v1160 = vpack.c.b16 %v1040, %v1039
  %v1161 = vpack.c.b16 %v1042, %v1041
  %v1162 = vpack.c.b16 %v1044, %v1043
  %v1163 = vpack.c.b16 %v1046, %v1045
  %v1164 = vpack.c.b16 %v1048, %v1047
  %v1165 = vpack.c.b16 %v1050, %v1049
  %v1166 = vpack.c.b16 %v1052, %v1051
  %v1167 = vpack.c.b16 %v1054, %v1053
  %v1168 = vpack.c.b16 %v1056, %v1055
  %v1169 = vpack.c.b16 %v1058, %v1057
  %v1170 = vpack.c.b16 %v1060, %v1059
  %v1171 = vpack.c.b16 %v1062, %v1061
  %v1172 = vpack.c.b16 %v1064, %v1063
  %v1173 = vpack.c.b16 %v1066, %v1065
  %v1174 = vpack.c.b16 %v1068, %v1067
  %v1175 = vpack.c.b16 %v1070, %v1069
  %v1176 = vpack.c.b16 %v1072, %v1071
  %v1177 = vpack.c.b16 %v1074, %v1073
  %v1178 = vpack.c.b16 %v1076, %v1075
  %v1179 = vpack.c.b16 %v1078, %v1077
  %v1180 = vpack.c.b16 %v1080, %v1079
  %v1181 = vpack.c.b16 %v1082, %v1081
  %v1182 = vpack.c.b16 %v1084, %v1083
  %v1183 = vpack.c.b16 %v1086, %v1085
  %v1184 = vpack.c.b16 %v1088, %v1087
  %1281 = vmatpush.bf16.msra.mxu0 %v1096
  %1282 = vmatpush.bf16.msra.mxu0 %v1095
  %1283 = vmatpush.bf16.msra.mxu0 %v1094
  %1284 = vmatpush.bf16.msra.mxu0 %v1093
  %1285 = vmatpush.bf16.msra.mxu0 %v1092
  %1286 = vmatpush.bf16.msra.mxu0 %v1091
  %1287 = vmatpush.bf16.msra.mxu0 %v1090
  %1288 = vmatpush.bf16.msra.mxu0 %v1089
  %1289 = vmatmul.bf16.gmra.mxu0 %v497
  %v1290 = vpop.f32.mrf.mxu0
  %v1291 = vadd.f32 %v703, %v1290
  %v1292 = vpop.f32.mrf.mxu0
  %1293 = vdwg.mxu0
  %1294 = vmatpush.bf16.msra.mxu0 %v1104
  %1295 = vmatpush.bf16.msra.mxu0 %v1103
  %1296 = vmatpush.bf16.msra.mxu0 %v1102
  %1297 = vmatpush.bf16.msra.mxu0 %v1101
  %1298 = vmatpush.bf16.msra.mxu0 %v1100
  %1299 = vmatpush.bf16.msra.mxu0 %v1099
  %1300 = vmatpush.bf16.msra.mxu0 %v1098
  %1301 = vmatpush.bf16.msra.mxu0 %v1097
  %1302 = vmatmul.bf16.gmra.mxu0 %v498
  %v1303 = vpop.f32.mrf.mxu0
  %v1304 = vadd.f32 %v1291, %v1303
  %v1305 = vpop.f32.mrf.mxu0
  %1306 = vdwg.mxu0
  %1307 = vmatpush.bf16.msra.mxu0 %v1112
  %1308 = vmatpush.bf16.msra.mxu0 %v1111
  %1309 = vmatpush.bf16.msra.mxu0 %v1110
  %1310 = vmatpush.bf16.msra.mxu0 %v1109
  %1311 = vmatpush.bf16.msra.mxu0 %v1108
  %1312 = vmatpush.bf16.msra.mxu0 %v1107
  %1313 = vmatpush.bf16.msra.mxu0 %v1106
  %1314 = vmatpush.bf16.msra.mxu0 %v1105
  %1315 = vmatmul.bf16.gmra.mxu0 %v499
  %v1316 = vpop.f32.mrf.mxu0
  %v1317 = vadd.f32 %v1304, %v1316
  %v1318 = vpop.f32.mrf.mxu0
  %1319 = vdwg.mxu0
  %1320 = vmatpush.bf16.msra.mxu0 %v1120
  %1321 = vmatpush.bf16.msra.mxu0 %v1119
  %1322 = vmatpush.bf16.msra.mxu0 %v1118
  %1323 = vmatpush.bf16.msra.mxu0 %v1117
  %1324 = vmatpush.bf16.msra.mxu0 %v1116
  %1325 = vmatpush.bf16.msra.mxu0 %v1115
  %1326 = vmatpush.bf16.msra.mxu0 %v1114
  %1327 = vmatpush.bf16.msra.mxu0 %v1113
  %1328 = vmatmul.bf16.gmra.mxu0 %v500
  %v1329 = vpop.f32.mrf.mxu0
  %v1330 = vadd.f32 %v1317, %v1329
  %v1331 = vpop.f32.mrf.mxu0
  %1332 = vdwg.mxu0
  %1333 = vmatpush.bf16.msra.mxu0 %v1128
  %1334 = vmatpush.bf16.msra.mxu0 %v1127
  %1335 = vmatpush.bf16.msra.mxu0 %v1126
  %1336 = vmatpush.bf16.msra.mxu0 %v1125
  %1337 = vmatpush.bf16.msra.mxu0 %v1124
  %1338 = vmatpush.bf16.msra.mxu0 %v1123
  %1339 = vmatpush.bf16.msra.mxu0 %v1122
  %1340 = vmatpush.bf16.msra.mxu0 %v1121
  %1341 = vmatmul.bf16.gmra.mxu0 %v501
  %v1342 = vpop.f32.mrf.mxu0
  %v1343 = vadd.f32 %v1330, %v1342
  %v1344 = vpop.f32.mrf.mxu0
  %1345 = vdwg.mxu0
  %1346 = vmatpush.bf16.msra.mxu0 %v1136
  %1347 = vmatpush.bf16.msra.mxu0 %v1135
  %1348 = vmatpush.bf16.msra.mxu0 %v1134
  %1349 = vmatpush.bf16.msra.mxu0 %v1133
  %1350 = vmatpush.bf16.msra.mxu0 %v1132
  %1351 = vmatpush.bf16.msra.mxu0 %v1131
  %1352 = vmatpush.bf16.msra.mxu0 %v1130
  %1353 = vmatpush.bf16.msra.mxu0 %v1129
  %1354 = vmatmul.bf16.gmra.mxu0 %v502
  %v1355 = vpop.f32.mrf.mxu0
  %v1356 = vadd.f32 %v1343, %v1355
  %v1357 = vpop.f32.mrf.mxu0
  %1358 = vdwg.mxu0
  %1359 = vmatpush.bf16.msra.mxu0 %v1144
  %1360 = vmatpush.bf16.msra.mxu0 %v1143
  %1361 = vmatpush.bf16.msra.mxu0 %v1142
  %1362 = vmatpush.bf16.msra.mxu0 %v1141
  %1363 = vmatpush.bf16.msra.mxu0 %v1140
  %1364 = vmatpush.bf16.msra.mxu0 %v1139
  %1365 = vmatpush.bf16.msra.mxu0 %v1138
  %1366 = vmatpush.bf16.msra.mxu0 %v1137
  %1367 = vmatmul.bf16.gmra.mxu0 %v503
  %v1368 = vpop.f32.mrf.mxu0
  %v1369 = vadd.f32 %v1356, %v1368
  %v1370 = vpop.f32.mrf.mxu0
  %1371 = vdwg.mxu0
  %1372 = vmatpush.bf16.msra.mxu0 %v1152
  %1373 = vmatpush.bf16.msra.mxu0 %v1151
  %1374 = vmatpush.bf16.msra.mxu0 %v1150
  %1375 = vmatpush.bf16.msra.mxu0 %v1149
  %1376 = vmatpush.bf16.msra.mxu0 %v1148
  %1377 = vmatpush.bf16.msra.mxu0 %v1147
  %1378 = vmatpush.bf16.msra.mxu0 %v1146
  %1379 = vmatpush.bf16.msra.mxu0 %v1145
  %1380 = vmatmul.bf16.gmra.mxu0 %v504
  %v1381 = vpop.f32.mrf.mxu0
  %v1382 = vadd.f32 %v1369, %v1381
  %v1383 = vpop.f32.mrf.mxu0
  %1384 = vdwg.mxu0
  %1385 = vmatpush.bf16.msra.mxu0 %v1160
  %1386 = vmatpush.bf16.msra.mxu0 %v1159
  %1387 = vmatpush.bf16.msra.mxu0 %v1158
  %1388 = vmatpush.bf16.msra.mxu0 %v1157
  %1389 = vmatpush.bf16.msra.mxu0 %v1156
  %1390 = vmatpush.bf16.msra.mxu0 %v1155
  %1391 = vmatpush.bf16.msra.mxu0 %v1154
  %1392 = vmatpush.bf16.msra.mxu0 %v1153
  %1393 = vmatmul.bf16.gmra.mxu0 %v505
  %v1394 = vpop.f32.mrf.mxu0
  %v1395 = vadd.f32 %v1382, %v1394
  %v1396 = vpop.f32.mrf.mxu0
  %1397 = vdwg.mxu0
  %1398 = vmatpush.bf16.msra.mxu0 %v1168
  %1399 = vmatpush.bf16.msra.mxu0 %v1167
  %1400 = vmatpush.bf16.msra.mxu0 %v1166
  %1401 = vmatpush.bf16.msra.mxu0 %v1165
  %1402 = vmatpush.bf16.msra.mxu0 %v1164
  %1403 = vmatpush.bf16.msra.mxu0 %v1163
  %1404 = vmatpush.bf16.msra.mxu0 %v1162
  %1405 = vmatpush.bf16.msra.mxu0 %v1161
  %1406 = vmatmul.bf16.gmra.mxu0 %v506
  %v1407 = vpop.f32.mrf.mxu0
  %v1408 = vadd.f32 %v1395, %v1407
  %v1409 = vpop.f32.mrf.mxu0
  %1410 = vdwg.mxu0
  %1411 = vmatpush.bf16.msra.mxu0 %v1176
  %1412 = vmatpush.bf16.msra.mxu0 %v1175
  %1413 = vmatpush.bf16.msra.mxu0 %v1174
  %1414 = vmatpush.bf16.msra.mxu0 %v1173
  %1415 = vmatpush.bf16.msra.mxu0 %v1172
  %1416 = vmatpush.bf16.msra.mxu0 %v1171
  %1417 = vmatpush.bf16.msra.mxu0 %v1170
  %1418 = vmatpush.bf16.msra.mxu0 %v1169
  %1419 = vmatmul.bf16.gmra.mxu0 %v507
  %v1420 = vpop.f32.mrf.mxu0
  %v1421 = vadd.f32 %v1408, %v1420
  %v1422 = vpop.f32.mrf.mxu0
  %1423 = vdwg.mxu0
  %1424 = vmatpush.bf16.msra.mxu0 %v1184
  %1425 = vmatpush.bf16.msra.mxu0 %v1183
  %1426 = vmatpush.bf16.msra.mxu0 %v1182
  %1427 = vmatpush.bf16.msra.mxu0 %v1181
  %1428 = vmatpush.bf16.msra.mxu0 %v1180
  %1429 = vmatpush.bf16.msra.mxu0 %v1179
  %1430 = vmatpush.bf16.msra.mxu0 %v1178
  %1431 = vmatpush.bf16.msra.mxu0 %v1177
  %1432 = vmatmul.bf16.gmra.mxu0 %v508
  %v1433 = vpop.f32.mrf.mxu0
  %v1434 = vadd.f32 %v1421, %v1433
  %v1435 = vpop.f32.mrf.mxu0
  %1436 = vdwg.mxu0
  %vm1437 = vcmask 23552
  %1438 = vst.msk [vmem:[%s5] sm:$0xff] %vm1437, %v1434
  // Predicated region
  $region22: #{tpu_custom_call.1} parent=0 // pred_check
    _
  $region23: #{tpu_custom_call.1} parent=0 // pred_check_branch
    %1440 = sbr.rel (0) target = $region25
  $region24: #{tpu_custom_call.1} parent=0 // pred_region
    _
  $region25: #{tpu_custom_call.1} parent=0 // pred_fallthru
    _
  // Predicated region
  $region26: #{tpu_custom_call.1} parent=0 // pred_check
    _
  $region27: #{tpu_custom_call.1} parent=0 // pred_check_branch
    %1442 = sbr.rel (0) target = $region29
  $region28: #{tpu_custom_call.1} parent=0 // pred_region
    _
  $region29: #{tpu_custom_call.1} parent=0 // pred_fallthru
    _

</llo_original>
